<compile_context>
chip_gen: v7x
topology: tpu7x:2x2x1
jax: 0.10.0
libtpu: 0.0.40
codegen_flags: <defaults>
</compile_context>

<pallas_src>
import functools

import jax
import jax.numpy as jnp
from jax.experimental import pallas as pl
from jax.experimental.pallas import tpu as pltpu


def _round_up(x, m):
    return (x + m - 1) // m * m


def policy_kernel(x_ref, w1_ref, b1_ref, w2_ref, b2_ref, w3_ref, b3_ref,
                  out_ref, *, action_dim):
    # fc1 + ReLU (bf16 operands on the MXU, f32 accumulate)
    h1 = jnp.dot(x_ref[...], w1_ref[...],
                 preferred_element_type=jnp.float32) + b1_ref[...]
    h1 = jnp.maximum(h1, 0.0).astype(jnp.bfloat16)

    # fc2 + ReLU
    h2 = jnp.dot(h1, w2_ref[...],
                 preferred_element_type=jnp.float32) + b2_ref[...]
    h2 = jnp.maximum(h2, 0.0).astype(jnp.bfloat16)

    # fc3: single padded lane-dense head.  Columns [0, A) are mean, columns
    # [A, 2A) are log_std; the rest is zero padding (sliced off in the wrapper).
    y = jnp.dot(h2, w3_ref[...],
                preferred_element_type=jnp.float32) + b3_ref[...]

    col = jax.lax.broadcasted_iota(jnp.int32, y.shape, 1)
    is_std = (col >= action_dim) & (col < 2 * action_dim)
    std_vals = jnp.exp(jnp.clip(y, -20.0, 2.0))
    out_ref[...] = jnp.where(is_std, std_vals, y)


def prepare_params(params):
    """One-time packing of the f32 (in,out)-layout params into kernel layout.

    Hoisted out of the per-call forward path: bf16 weight casts and the
    zero-padded, lane-dense (hidden, 128) fc3 head are done once.
    """
    w1, b1, w2, b2, w3, b3 = params
    state_dim, hidden = w1.shape
    out_dim = w3.shape[1]                       # 2 * action_dim
    action_dim = out_dim // 2
    n_pad = _round_up(max(out_dim, 128), 128)   # lane-dense head width

    w3p = jnp.zeros((hidden, n_pad), jnp.bfloat16).at[:, :out_dim].set(
        w3.astype(jnp.bfloat16))
    b3p = jnp.zeros((1, n_pad), jnp.float32).at[:, :out_dim].set(
        b3.astype(jnp.float32))

    return dict(
        w1=w1.astype(jnp.bfloat16), b1=b1.astype(jnp.float32),
        w2=w2.astype(jnp.bfloat16), b2=b2.astype(jnp.float32),
        w3=w3p, b3=b3p,
        state_dim=state_dim, hidden=hidden,
        action_dim=action_dim, n_pad=n_pad,
    )


def _choose_tile(B, block_batch):
    """Pick the batch tile TB (rows per grid step)."""
    Bp8 = _round_up(max(B, 1), 8)
    if Bp8 <= 256:
        return Bp8                               # single small tile
    # Large batch: big tiles (multiples of 256) to amortize per-step overhead,
    # but keep >= 2 grid steps so both TensorCores are used on v7x.
    tb = min(_round_up(block_batch, 256), _round_up(Bp8, 256))
    half = _round_up(-(-Bp8 // 2), 256)
    return max(min(tb, half), 256)


def policy_forward(x, packed, *, block_batch=1024):
    """x: (B, state_dim) float32. Returns (mean, std), each (B, action_dim) f32."""
    A = packed["action_dim"]
    state_dim = packed["state_dim"]
    hidden = packed["hidden"]
    n_pad = packed["n_pad"]

    B = x.shape[0]
    TB = _choose_tile(B, block_batch)
    Bp = _round_up(B, TB)
    xp = x if Bp == B else jnp.pad(x, ((0, Bp - B), (0, 0)))
    xp = xp.astype(jnp.bfloat16)                 # fused pad + bf16 cast
    grid = (Bp // TB,)

    const = lambda i: (0, 0)                     # weights / biases: VMEM-resident
    batch = lambda i: (i, 0)                     # x / output: tiled over the grid

    in_specs = [
        pl.BlockSpec((TB, state_dim), batch),
        pl.BlockSpec((state_dim, hidden), const),
        pl.BlockSpec((1, hidden), const),
        pl.BlockSpec((hidden, hidden), const),
        pl.BlockSpec((1, hidden), const),
        pl.BlockSpec((hidden, n_pad), const),
        pl.BlockSpec((1, n_pad), const),
    ]
    out_specs = pl.BlockSpec((TB, n_pad), batch)
    out_shape = jax.ShapeDtypeStruct((Bp, n_pad), jnp.float32)

    flops = 2 * Bp * (state_dim * hidden + hidden * hidden + hidden * n_pad)
    bytes_accessed = (
        xp.size * 2
        + (packed["w1"].size + packed["w2"].size + packed["w3"].size) * 2
        + (packed["b1"].size + packed["b2"].size + packed["b3"].size) * 4
        + Bp * n_pad * 4
    )
    cost = pl.CostEstimate(flops=flops, transcendentals=Bp * n_pad,
                           bytes_accessed=bytes_accessed)

    out = pl.pallas_call(
        functools.partial(policy_kernel, action_dim=A),
        out_shape=out_shape,
        grid=grid,
        in_specs=in_specs,
        out_specs=out_specs,
        compiler_params=pltpu.CompilerParams(
            dimension_semantics=("parallel",)),
        cost_estimate=cost,
    )(xp, packed["w1"], packed["b1"], packed["w2"], packed["b2"],
      packed["w3"], packed["b3"])

    mean = out[:B, :A]
    std = out[:B, A:2 * A]
    return mean, std


def init_params(key, state_dim, action_dim, hidden_dim=256):
    """Deterministic init mimicking nn.Linear's U(-1/sqrt(in), 1/sqrt(in)), f32."""
    def linear(k, fan_in, fan_out):
        kw, kb = jax.random.split(k)
        bound = 1.0 / jnp.sqrt(fan_in)
        w = jax.random.uniform(kw, (fan_in, fan_out), jnp.float32, -bound, bound)
        b = jax.random.uniform(kb, (1, fan_out), jnp.float32, -bound, bound)
        return w, b

    k1, k2, k3 = jax.random.split(key, 3)
    w1, b1 = linear(k1, state_dim, hidden_dim)
    w2, b2 = linear(k2, hidden_dim, hidden_dim)
    w3, b3 = linear(k3, hidden_dim, 2 * action_dim)
    return (w1, b1, w2, b2, w3, b3)


def policy_forward_ref(x, params):
    """Pure-JAX f32 reference for correctness checking."""
    w1, b1, w2, b2, w3, b3 = params
    h1 = jnp.maximum(x @ w1 + b1, 0.0)
    h2 = jnp.maximum(h1 @ w2 + b2, 0.0)
    y = h2 @ w3 + b3
    action_dim = w3.shape[1] // 2
    mean = y[:, :action_dim]
    log_std = jnp.clip(y[:, action_dim:], -20.0, 2.0)
    return mean, jnp.exp(log_std)


def _check(x, packed, params, action_dim, **kw):
    mean, std = policy_forward(x, packed, **kw)
    jax.block_until_ready((mean, std))
    mean_r, std_r = policy_forward_ref(x, params)
    assert mean.shape == (x.shape[0], action_dim)
    assert std.shape == (x.shape[0], action_dim)
    # bf16 MXU path vs f32 reference -> loosened tolerance.
    assert jnp.allclose(mean, mean_r, atol=2e-2, rtol=2e-2), "mean mismatch"
    assert jnp.allclose(std, std_r, atol=2e-2, rtol=2e-2), "std mismatch"
    assert bool(jnp.all(std > 0))


if __name__ == "__main__":
    key = jax.random.PRNGKey(0)
    k_params, k_x1, k_x2 = jax.random.split(key, 3)

    batch = 8
    state_dim = 32
    action_dim = 8
    hidden_dim = 256

    params = init_params(k_params, state_dim, action_dim, hidden_dim)
    packed = prepare_params(params)          # one-time packing, out of the hot path

    # small batch (single tile)
    x_small = jax.random.normal(k_x1, (batch, state_dim), jnp.float32)
    _check(x_small, packed, params, action_dim)

    # larger, non-divisible batch -> exercises the multi-step batch grid + padding
    x_big = jax.random.normal(k_x2, (300, state_dim), jnp.float32)
    _check(x_big, packed, params, action_dim, block_batch=1024)

    # TODO(synk): PolicyNetwork.predict (Normal.rsample + tanh squash) is host-side
    # sampling, not part of forward; implement with pltpu.prng_* if needed later.
    print("KERNEL_OK")
</pallas_src>

<mosaic_0001>
module attributes {stable_mosaic.version = 11 : i64} {
  func.func @policy_kernel(%arg0: i32, %arg1: memref<8x32xbf16, #tpu.memory_space<vmem>>, %arg2: memref<32x256xbf16, #tpu.memory_space<vmem>>, %arg3: memref<1x256xf32, #tpu.memory_space<vmem>>, %arg4: memref<256x256xbf16, #tpu.memory_space<vmem>>, %arg5: memref<1x256xf32, #tpu.memory_space<vmem>>, %arg6: memref<256x128xbf16, #tpu.memory_space<vmem>>, %arg7: memref<1x128xf32, #tpu.memory_space<vmem>>, %arg8: memref<8x128xf32, #tpu.memory_space<vmem>>) attributes {dimension_semantics = [#tpu.dimension_semantics<parallel>], iteration_bounds = array<i64: 1>, scalar_prefetch = 0 : i64, scratch_operands = 0 : i64, tpu.core_type = #tpu.core_type<tc>, window_params = [{transform_indices = @transform_0, window_bounds = array<i64: 8, 32>}, {pipeline_mode = #tpu.pipeline_mode<synchronous>, transform_indices = @transform_1, window_bounds = array<i64: 32, 256>}, {pipeline_mode = #tpu.pipeline_mode<synchronous>, transform_indices = @transform_2, window_bounds = array<i64: 1, 256>}, {pipeline_mode = #tpu.pipeline_mode<synchronous>, transform_indices = @transform_3, window_bounds = array<i64: 256, 256>}, {pipeline_mode = #tpu.pipeline_mode<synchronous>, transform_indices = @transform_4, window_bounds = array<i64: 1, 256>}, {pipeline_mode = #tpu.pipeline_mode<synchronous>, transform_indices = @transform_5, window_bounds = array<i64: 256, 128>}, {pipeline_mode = #tpu.pipeline_mode<synchronous>, transform_indices = @transform_6, window_bounds = array<i64: 1, 128>}, {transform_indices = @transform_7, window_bounds = array<i64: 8, 128>}]} {
    %c0 = arith.constant 0 : index
    %c0_0 = arith.constant 0 : index
    %0 = vector.load %arg1[%c0, %c0_0] : memref<8x32xbf16, #tpu.memory_space<vmem>>, vector<8x32xbf16>
    %c0_1 = arith.constant 0 : index
    %c0_2 = arith.constant 0 : index
    %1 = vector.load %arg2[%c0_1, %c0_2] : memref<32x256xbf16, #tpu.memory_space<vmem>>, vector<32x256xbf16>
    %cst = arith.constant dense<0.000000e+00> : vector<8x256xf32>
    %2 = tpu.matmul %0, %1, %cst {dimension_numbers = #tpu.dot_dimension_numbers<[1], [0], [0], [1], [0, 0, 1, 1], [], []>} : vector<8x32xbf16>, vector<32x256xbf16>, vector<8x256xf32> -> vector<8x256xf32>
    %c0_3 = arith.constant 0 : index
    %c0_4 = arith.constant 0 : index
    %3 = vector.load %arg3[%c0_3, %c0_4] : memref<1x256xf32, #tpu.memory_space<vmem>>, vector<1x256xf32>
    %4 = vector.broadcast %3 : vector<1x256xf32> to vector<8x256xf32>
    %5 = arith.addf %2, %4 : vector<8x256xf32>
    %cst_5 = arith.constant 0.000000e+00 : f32
    %6 = vector.broadcast %cst_5 : f32 to vector<8x256xf32>
    %7 = arith.maximumf %5, %6 : vector<8x256xf32>
    %8 = arith.truncf %7 : vector<8x256xf32> to vector<8x256xbf16>
    %c0_6 = arith.constant 0 : index
    %c0_7 = arith.constant 0 : index
    %9 = vector.load %arg4[%c0_6, %c0_7] : memref<256x256xbf16, #tpu.memory_space<vmem>>, vector<256x256xbf16>
    %cst_8 = arith.constant dense<0.000000e+00> : vector<8x256xf32>
    %10 = tpu.matmul %8, %9, %cst_8 {dimension_numbers = #tpu.dot_dimension_numbers<[1], [0], [0], [1], [0, 0, 1, 1], [], []>} : vector<8x256xbf16>, vector<256x256xbf16>, vector<8x256xf32> -> vector<8x256xf32>
    %c0_9 = arith.constant 0 : index
    %c0_10 = arith.constant 0 : index
    %11 = vector.load %arg5[%c0_9, %c0_10] : memref<1x256xf32, #tpu.memory_space<vmem>>, vector<1x256xf32>
    %12 = vector.broadcast %11 : vector<1x256xf32> to vector<8x256xf32>
    %13 = arith.addf %10, %12 : vector<8x256xf32>
    %cst_11 = arith.constant 0.000000e+00 : f32
    %14 = vector.broadcast %cst_11 : f32 to vector<8x256xf32>
    %15 = arith.maximumf %13, %14 : vector<8x256xf32>
    %16 = arith.truncf %15 : vector<8x256xf32> to vector<8x256xbf16>
    %c0_12 = arith.constant 0 : index
    %c0_13 = arith.constant 0 : index
    %17 = vector.load %arg6[%c0_12, %c0_13] : memref<256x128xbf16, #tpu.memory_space<vmem>>, vector<256x128xbf16>
    %cst_14 = arith.constant dense<0.000000e+00> : vector<8x128xf32>
    %18 = tpu.matmul %16, %17, %cst_14 {dimension_numbers = #tpu.dot_dimension_numbers<[1], [0], [0], [1], [0, 0, 1, 1], [], []>} : vector<8x256xbf16>, vector<256x128xbf16>, vector<8x128xf32> -> vector<8x128xf32>
    %c0_15 = arith.constant 0 : index
    %c0_16 = arith.constant 0 : index
    %19 = vector.load %arg7[%c0_15, %c0_16] : memref<1x128xf32, #tpu.memory_space<vmem>>, vector<1x128xf32>
    %20 = vector.broadcast %19 : vector<1x128xf32> to vector<8x128xf32>
    %21 = arith.addf %18, %20 : vector<8x128xf32>
    %22 = tpu.iota {dimensions = array<i32: 1>} : vector<8x128xi32>
    %c8_i32 = arith.constant 8 : i32
    %23 = vector.broadcast %c8_i32 : i32 to vector<8x128xi32>
    %24 = arith.cmpi sge, %22, %23 : vector<8x128xi32>
    %c16_i32 = arith.constant 16 : i32
    %25 = vector.broadcast %c16_i32 : i32 to vector<8x128xi32>
    %26 = arith.cmpi slt, %22, %25 : vector<8x128xi32>
    %27 = arith.andi %24, %26 : vector<8x128xi1>
    %cst_17 = arith.constant -2.000000e+01 : f32
    %cst_18 = arith.constant 2.000000e+00 : f32
    %28 = vector.broadcast %cst_17 : f32 to vector<8x128xf32>
    %29 = arith.maximumf %28, %21 : vector<8x128xf32>
    %30 = vector.broadcast %cst_18 : f32 to vector<8x128xf32>
    %31 = arith.minimumf %30, %29 : vector<8x128xf32>
    %32 = math.exp %31 : vector<8x128xf32>
    %33 = arith.select %27, %32, %21 : vector<8x128xi1>, vector<8x128xf32>
    %c0_19 = arith.constant 0 : index
    %c0_20 = arith.constant 0 : index
    %34 = vector.load %arg8[%c0_19, %c0_20] : memref<8x128xf32, #tpu.memory_space<vmem>>, vector<8x128xf32>
    tpu.vector_store %arg8[%c0_19, %c0_20], %33 {strides = array<i32>} : memref<8x128xf32, #tpu.memory_space<vmem>>, vector<8x128xf32>,
    return
  }
  func.func @transform_0(%arg0: i32) -> (i32, i32) {
    %c0_i32 = arith.constant 0 : i32
    %c0_i32_0 = arith.constant 0 : i32
    return %arg0, %c0_i32 : i32, i32
  }
  func.func @transform_1(%arg0: i32) -> (i32, i32) {
    %c0_i32 = arith.constant 0 : i32
    %c0_i32_0 = arith.constant 0 : i32
    %c0_i32_1 = arith.constant 0 : i32
    return %c0_i32, %c0_i32_0 : i32, i32
  }
  func.func @transform_2(%arg0: i32) -> (i32, i32) {
    %c0_i32 = arith.constant 0 : i32
    %c0_i32_0 = arith.constant 0 : i32
    %c0_i32_1 = arith.constant 0 : i32
    return %c0_i32, %c0_i32_0 : i32, i32
  }
  func.func @transform_3(%arg0: i32) -> (i32, i32) {
    %c0_i32 = arith.constant 0 : i32
    %c0_i32_0 = arith.constant 0 : i32
    %c0_i32_1 = arith.constant 0 : i32
    return %c0_i32, %c0_i32_0 : i32, i32
  }
  func.func @transform_4(%arg0: i32) -> (i32, i32) {
    %c0_i32 = arith.constant 0 : i32
    %c0_i32_0 = arith.constant 0 : i32
    %c0_i32_1 = arith.constant 0 : i32
    return %c0_i32, %c0_i32_0 : i32, i32
  }
  func.func @transform_5(%arg0: i32) -> (i32, i32) {
    %c0_i32 = arith.constant 0 : i32
    %c0_i32_0 = arith.constant 0 : i32
    %c0_i32_1 = arith.constant 0 : i32
    return %c0_i32, %c0_i32_0 : i32, i32
  }
  func.func @transform_6(%arg0: i32) -> (i32, i32) {
    %c0_i32 = arith.constant 0 : i32
    %c0_i32_0 = arith.constant 0 : i32
    %c0_i32_1 = arith.constant 0 : i32
    return %c0_i32, %c0_i32_0 : i32, i32
  }
  func.func @transform_7(%arg0: i32) -> (i32, i32) {
    %c0_i32 = arith.constant 0 : i32
    %c0_i32_0 = arith.constant 0 : i32
    return %arg0, %c0_i32 : i32, i32
  }
}

</mosaic_0001>

<llo_original>
// kernel: tpu_custom_call.1
$region0: #{tpu_custom_call.1}
  #allocation0 [shape = 'u32[]', space=smem, size = 0x4, offset = 0x4, fixed_abs, tag = 'smem constant byte address 0x4 - core index']
  #allocation1 [shape = 'u32[144,128]{1,0:T(1,128)}', space=vmem, size = 0x12000, scoped, tag = 'internal scratch']
  %s0 = inlined_call_operand.hbm [shape: bf16[8,32], index: 0, kind: input, shape index: {}]
  %s1 = inlined_call_operand.hbm [shape: bf16[32,256], index: 1, kind: input, shape index: {}]
  %s2 = inlined_call_operand.vmem [shape: f32[1,256], index: 2, kind: input, shape index: {}]
  %s3 = inlined_call_operand.hbm [shape: bf16[256,256], index: 3, kind: input, shape index: {}]
  %s4 = inlined_call_operand.vmem [shape: f32[1,256], index: 4, kind: input, shape index: {}]
  %s5 = inlined_call_operand.hbm [shape: bf16[256,128], index: 5, kind: input, shape index: {}]
  %s6 = inlined_call_operand.vmem [shape: f32[1,128], index: 6, kind: input, shape index: {}]
  %s7 = inlined_call_operand.hbm [shape: f32[8,128], index: 7, kind: output, shape index: {}]
  %s8 = sld [smem:[#allocation0]]
  $region54: #{tpu_custom_call.1} parent=0
    _
  %s10 = ssub.s32 1, %s8
  %s11 = scalar_select 0, %s10, %s8
  $region1: #{tpu_custom_call.1} parent=0
    #allocation2 [shape = 'u8[2048]{0}', space=vmem, size = 0x800, scoped, tag = 'input window, operand 0, single buffered']
    #allocation3 [shape = 's32[1]{0}', space=sflag, size = 0x4, scoped, tag = 'scoped memory for tpu_custom_call.1']
    #allocation4 [shape = 's32[1]{0}', space=sflag, size = 0x4, scoped, tag = 'scoped memory for tpu_custom_call.1']
    #allocation5 [shape = 'u8[16384]{0}', space=vmem, size = 0x4000, scoped, tag = 'input window, operand 1, single buffered']
    #allocation6 [shape = 's32[1]{0}', space=sflag, size = 0x4, scoped, tag = 'scoped memory for tpu_custom_call.1']
    #allocation7 [shape = 'u8[131072]{0}', space=vmem, size = 0x20000, scoped, tag = 'input window, operand 3, single buffered']
    #allocation8 [shape = 'u8[65536]{0}', space=vmem, size = 0x10000, scoped, tag = 'input window, operand 5, single buffered']
    #allocation9 [shape = 's32[1]{0}', space=sflag, size = 0x4, scoped, tag = 'scoped memory for tpu_custom_call.1']
    #allocation10 [shape = 'u8[4096]{0}', space=vmem, size = 0x1000, scoped, tag = 'output window, operand 0, single buffered']
    %12 = vsyncpa [#allocation3], 0
    %13 = vsyncpa [#allocation6], 0
    %14 = vsyncpa [#allocation9], 0
    %15 = vsyncpa [#allocation4], 0
    // Predicated region
    $region2: #{tpu_custom_call.1} parent=1 // pred_check
      _
    $region3: #{tpu_custom_call.1} parent=1 // pred_check_branch
      %17 = sbr.rel (0) target = $region5
    $region4: #{tpu_custom_call.1} parent=1 // pred_region
      %s19 = ssub.s32 64, 64
      %20 = vsyncadd [#allocation3], %s19
      %s22 = sshll.u32 [#allocation2], 4
      %s23 = int_to_ptr.vmem [resolvable:$true] %s22
      %25 = dma.hbm_to_vmem [thread:$0]  %s0, 64, %s23, [#allocation3]
    $region5: #{tpu_custom_call.1} parent=1 // pred_fallthru
      _
    // Predicated region
    $region6: #{tpu_custom_call.1} parent=1 // pred_check
      _
    $region7: #{tpu_custom_call.1} parent=1 // pred_check_branch
      %27 = sbr.rel (0) target = $region9
    $region8: #{tpu_custom_call.1} parent=1 // pred_region
      %s29 = ssub.s32 512, 512
      %30 = vsyncadd [#allocation6], %s29
      %s31 = sshll.u32 [#allocation5], 4
      %s32 = int_to_ptr.vmem [resolvable:$true] %s31
      %37 = dma.hbm_to_vmem [thread:$0]  %s1, 512, %s32, [#allocation6], 128, 128, 8
    $region9: #{tpu_custom_call.1} parent=1 // pred_fallthru
      _
    // Predicated region
    $region10: #{tpu_custom_call.1} parent=1 // pred_check
      _
    $region11: #{tpu_custom_call.1} parent=1 // pred_check_branch
      %39 = sbr.rel (0) target = $region13
    $region12: #{tpu_custom_call.1} parent=1 // pred_region
      _
    $region13: #{tpu_custom_call.1} parent=1 // pred_fallthru
      _
    // Predicated region
    $region14: #{tpu_custom_call.1} parent=1 // pred_check
      _
    $region15: #{tpu_custom_call.1} parent=1 // pred_check_branch
      %41 = sbr.rel (0) target = $region17
    $region16: #{tpu_custom_call.1} parent=1 // pred_region
      %s43 = ssub.s32 4096, 4096
      %44 = vsyncadd [#allocation6], %s43
      %s45 = sshll.u32 [#allocation7], 4
      %s46 = int_to_ptr.vmem [resolvable:$true] %s45
      %51 = dma.hbm_to_vmem [thread:$0]  %s3, 4096, %s46, [#allocation6], 128, 128, 8
    $region17: #{tpu_custom_call.1} parent=1 // pred_fallthru
      _
    // Predicated region
    $region18: #{tpu_custom_call.1} parent=1 // pred_check
      _
    $region19: #{tpu_custom_call.1} parent=1 // pred_check_branch
      %53 = sbr.rel (0) target = $region21
    $region20: #{tpu_custom_call.1} parent=1 // pred_region
      _
    $region21: #{tpu_custom_call.1} parent=1 // pred_fallthru
      _
    // Predicated region
    $region22: #{tpu_custom_call.1} parent=1 // pred_check
      _
    $region23: #{tpu_custom_call.1} parent=1 // pred_check_branch
      %55 = sbr.rel (0) target = $region25
    $region24: #{tpu_custom_call.1} parent=1 // pred_region
      %s57 = ssub.s32 2048, 2048
      %58 = vsyncadd [#allocation9], %s57
      %s59 = sshll.u32 [#allocation8], 4
      %s60 = int_to_ptr.vmem [resolvable:$true] %s59
      %65 = dma.hbm_to_vmem [thread:$0]  %s5, 2048, %s60, [#allocation9], 64, 64, 4
    $region25: #{tpu_custom_call.1} parent=1 // pred_fallthru
      _
    // Predicated region
    $region26: #{tpu_custom_call.1} parent=1 // pred_check
      _
    $region27: #{tpu_custom_call.1} parent=1 // pred_check_branch
      %67 = sbr.rel (0) target = $region29
    $region28: #{tpu_custom_call.1} parent=1 // pred_region
      _
    $region29: #{tpu_custom_call.1} parent=1 // pred_fallthru
      _
    // Predicated region
    $region30: #{tpu_custom_call.1} parent=1 // pred_check
      _
    $region31: #{tpu_custom_call.1} parent=1 // pred_check_branch
      %69 = sbr.rel (0) target = $region33
    $region32: #{tpu_custom_call.1} parent=1 // pred_region
      %70 = dma.done [#allocation3], 64
    $region33: #{tpu_custom_call.1} parent=1 // pred_fallthru
      _
    // Predicated region
    $region34: #{tpu_custom_call.1} parent=1 // pred_check
      _
    $region35: #{tpu_custom_call.1} parent=1 // pred_check_branch
      %72 = sbr.rel (0) target = $region37
    $region36: #{tpu_custom_call.1} parent=1 // pred_region
      %73 = dma.done [#allocation6], 512
    $region37: #{tpu_custom_call.1} parent=1 // pred_fallthru
      _
    // Predicated region
    $region38: #{tpu_custom_call.1} parent=1 // pred_check
      _
    $region39: #{tpu_custom_call.1} parent=1 // pred_check_branch
      %75 = sbr.rel (0) target = $region41
    $region40: #{tpu_custom_call.1} parent=1 // pred_region
      %76 = dma.done [#allocation6], 4096
    $region41: #{tpu_custom_call.1} parent=1 // pred_fallthru
      _
    // Predicated region
    $region42: #{tpu_custom_call.1} parent=1 // pred_check
      _
    $region43: #{tpu_custom_call.1} parent=1 // pred_check_branch
      %78 = sbr.rel (0) target = $region45
    $region44: #{tpu_custom_call.1} parent=1 // pred_region
      %79 = dma.done [#allocation9], 2048
    $region45: #{tpu_custom_call.1} parent=1 // pred_fallthru
      _
    %v81 = vld [vmem:[#allocation2] sm:$0xf]
    %v82 = vld [vmem:[#allocation5] sm:$0xff]
    %v83 = vld [vmem:[#allocation5 + $0x8] sm:$0xff]
    %v84 = vld [vmem:[#allocation5 + $0x10] sm:$0xff]
    %v85 = vld [vmem:[#allocation5 + $0x18] sm:$0xff]
    %v86 = vld [vmem:[%s2] sm:$0x3]
    %v88 = vlaneseq
    %v89 = vshrl.u32 %v88, 7
    %v90 = vsub.s32 0, %v89
    %v91 = vrot.slane %v86, %v90
    %v92 = vlaneseq
    %v93 = vshrl.u32 %v92, 7
    %v94 = vsub.s32 1, %v93
    %v95 = vrot.slane %v86, %v94
    %v102 = vunpack.c.l.b16 %v82
    %v103 = vunpack.c.h.b16 %v82
    %v104 = vunpack.c.l.b16 %v83
    %v105 = vunpack.c.h.b16 %v83
    %v106 = vunpack.c.l.b16 %v84
    %v107 = vunpack.c.h.b16 %v84
    %v108 = vunpack.c.l.b16 %v85
    %v109 = vunpack.c.h.b16 %v85
    %v110 = vpack.c.b16 %v104, %v102
    %v111 = vpack.c.b16 %v105, %v103
    %v112 = vpack.c.b16 %v108, %v106
    %v113 = vpack.c.b16 %v109, %v107
    %vm118 = vcmask 261120
    %v120 = vsel %vm118, %v81, 0
    %122 = vmatprep.subr.bf16.mxu0 %v111
    %123 = vmatpush1.bf16.msra.mxu0 %v110
    %124 = vmatprep.subr.bf16.mxu0 %v113
    %125 = vmatpush1.bf16.msra.mxu0 %v112
    %126 = vmatprep.subr.bf16.mxu0 0
    %127 = vmatpush1.bf16.msra.mxu0 0
    %128 = vmatprep.subr.bf16.mxu0 0
    %129 = vmatpush1.bf16.msra.mxu0 0
    %130 = vmatprep.subr.bf16.mxu0 0
    %131 = vmatpush1.bf16.msra.mxu0 0
    %132 = vmatprep.subr.bf16.mxu0 0
    %133 = vmatpush1.bf16.msra.mxu0 0
    %134 = vmatprep.subr.bf16.mxu0 0
    %135 = vmatpush1.bf16.msra.mxu0 0
    %136 = vmatprep.subr.bf16.mxu0 0
    %137 = vmatpush1.bf16.msra.mxu0 0
    %138 = vmatprep.subr.bf16.mxu0 0
    %139 = vmatpush1.bf16.msra.mxu0 0
    %140 = vmatprep.subr.bf16.mxu0 0
    %141 = vmatpush1.bf16.msra.mxu0 0
    %142 = vmatprep.subr.bf16.mxu0 0
    %143 = vmatpush1.bf16.msra.mxu0 0
    %144 = vmatprep.subr.bf16.mxu0 0
    %145 = vmatpush1.bf16.msra.mxu0 0
    %146 = vmatprep.subr.bf16.mxu0 0
    %147 = vmatpush1.bf16.msra.mxu0 0
    %148 = vmatprep.subr.bf16.mxu0 0
    %149 = vmatpush1.bf16.msra.mxu0 0
    %150 = vmatprep.subr.bf16.mxu0 0
    %151 = vmatpush1.bf16.msra.mxu0 0
    %152 = vmatprep.subr.bf16.mxu0 0
    %153 = vmatpush1.bf16.msra.mxu0 0
    %154 = vmatprep.mubr.bf16.mxu0 0
    %155 = vmatmul.mubr.bf16.gmra.mrb[0].mxu0 %v120
    %v156 = vpop.f32.mrb[0].mxu0
    %v157 = vadd.f32 %v91, %v156
    %v158 = vpop.f32.mrb[0].mxu0
    %v159 = vadd.f32 %v95, %v158
    %v160 = vpop.f32.mrb[0].mxu0
    %v161 = vpop.f32.mrb[0].mxu0
    %162 = vdwg.mxu0
    %v163 = vmax.f32 %v157, 0.0
    %v164 = vmax.f32 %v159, 0.0
    %v165 = vpack.c.bf16 %v163, %v163
    %v166 = vpack.c.bf16 %v164, %v164
    %v167 = vld [vmem:[#allocation7] sm:$0xff]
    %v168 = vld [vmem:[#allocation7 + $0x8] sm:$0xff]
    %v169 = vld [vmem:[#allocation7 + $0x10] sm:$0xff]
    %v170 = vld [vmem:[#allocation7 + $0x18] sm:$0xff]
    %v171 = vld [vmem:[#allocation7 + $0x20] sm:$0xff]
    %v172 = vld [vmem:[#allocation7 + $0x28] sm:$0xff]
    %v173 = vld [vmem:[#allocation7 + $0x30] sm:$0xff]
    %v174 = vld [vmem:[#allocation7 + $0x38] sm:$0xff]
    %v175 = vld [vmem:[#allocation7 + $0x40] sm:$0xff]
    %v176 = vld [vmem:[#allocation7 + $0x48] sm:$0xff]
    %v177 = vld [vmem:[#allocation7 + $0x50] sm:$0xff]
    %v178 = vld [vmem:[#allocation7 + $0x58] sm:$0xff]
    %v179 = vld [vmem:[#allocation7 + $0x60] sm:$0xff]
    %v180 = vld [vmem:[#allocation7 + $0x68] sm:$0xff]
    %v181 = vld [vmem:[#allocation7 + $0x70] sm:$0xff]
    %v182 = vld [vmem:[#allocation7 + $0x78] sm:$0xff]
    %v183 = vld [vmem:[#allocation7 + $0x80] sm:$0xff]
    %v184 = vld [vmem:[#allocation7 + $0x88] sm:$0xff]
    %v185 = vld [vmem:[#allocation7 + $0x90] sm:$0xff]
    %v186 = vld [vmem:[#allocation7 + $0x98] sm:$0xff]
    %v187 = vld [vmem:[#allocation7 + $0xa0] sm:$0xff]
    %v188 = vld [vmem:[#allocation7 + $0xa8] sm:$0xff]
    %v189 = vld [vmem:[#allocation7 + $0xb0] sm:$0xff]
    %v190 = vld [vmem:[#allocation7 + $0xb8] sm:$0xff]
    %v191 = vld [vmem:[#allocation7 + $0xc0] sm:$0xff]
    %v192 = vld [vmem:[#allocation7 + $0xc8] sm:$0xff]
    %v193 = vld [vmem:[#allocation7 + $0xd0] sm:$0xff]
    %v194 = vld [vmem:[#allocation7 + $0xd8] sm:$0xff]
    %v195 = vld [vmem:[#allocation7 + $0xe0] sm:$0xff]
    %v196 = vld [vmem:[#allocation7 + $0xe8] sm:$0xff]
    %v197 = vld [vmem:[#allocation7 + $0xf0] sm:$0xff]
    %v198 = vld [vmem:[#allocation7 + $0xf8] sm:$0xff]
    %v199 = vld [vmem:[%s4] sm:$0x3]
    %v201 = vlaneseq
    %v202 = vshrl.u32 %v201, 7
    %v203 = vsub.s32 0, %v202
    %v204 = vrot.slane %v199, %v203
    %v205 = vlaneseq
    %v206 = vshrl.u32 %v205, 7
    %v207 = vsub.s32 1, %v206
    %v208 = vrot.slane %v199, %v207
    %v243 = vunpack.c.l.b16 %v167
    %v244 = vunpack.c.h.b16 %v167
    %v245 = vunpack.c.l.b16 %v168
    %v246 = vunpack.c.h.b16 %v168
    %v247 = vunpack.c.l.b16 %v169
    %v248 = vunpack.c.h.b16 %v169
    %v249 = vunpack.c.l.b16 %v170
    %v250 = vunpack.c.h.b16 %v170
    %v251 = vunpack.c.l.b16 %v171
    %v252 = vunpack.c.h.b16 %v171
    %v253 = vunpack.c.l.b16 %v172
    %v254 = vunpack.c.h.b16 %v172
    %v255 = vunpack.c.l.b16 %v173
    %v256 = vunpack.c.h.b16 %v173
    %v257 = vunpack.c.l.b16 %v174
    %v258 = vunpack.c.h.b16 %v174
    %v259 = vunpack.c.l.b16 %v175
    %v260 = vunpack.c.h.b16 %v175
    %v261 = vunpack.c.l.b16 %v176
    %v262 = vunpack.c.h.b16 %v176
    %v263 = vunpack.c.l.b16 %v177
    %v264 = vunpack.c.h.b16 %v177
    %v265 = vunpack.c.l.b16 %v178
    %v266 = vunpack.c.h.b16 %v178
    %v267 = vunpack.c.l.b16 %v179
    %v268 = vunpack.c.h.b16 %v179
    %v269 = vunpack.c.l.b16 %v180
    %v270 = vunpack.c.h.b16 %v180
    %v271 = vunpack.c.l.b16 %v181
    %v272 = vunpack.c.h.b16 %v181
    %v273 = vunpack.c.l.b16 %v182
    %v274 = vunpack.c.h.b16 %v182
    %v275 = vunpack.c.l.b16 %v183
    %v276 = vunpack.c.h.b16 %v183
    %v277 = vunpack.c.l.b16 %v184
    %v278 = vunpack.c.h.b16 %v184
    %v279 = vunpack.c.l.b16 %v185
    %v280 = vunpack.c.h.b16 %v185
    %v281 = vunpack.c.l.b16 %v186
    %v282 = vunpack.c.h.b16 %v186
    %v283 = vunpack.c.l.b16 %v187
    %v284 = vunpack.c.h.b16 %v187
    %v285 = vunpack.c.l.b16 %v188
    %v286 = vunpack.c.h.b16 %v188
    %v287 = vunpack.c.l.b16 %v189
    %v288 = vunpack.c.h.b16 %v189
    %v289 = vunpack.c.l.b16 %v190
    %v290 = vunpack.c.h.b16 %v190
    %v291 = vunpack.c.l.b16 %v191
    %v292 = vunpack.c.h.b16 %v191
    %v293 = vunpack.c.l.b16 %v192
    %v294 = vunpack.c.h.b16 %v192
    %v295 = vunpack.c.l.b16 %v193
    %v296 = vunpack.c.h.b16 %v193
    %v297 = vunpack.c.l.b16 %v194
    %v298 = vunpack.c.h.b16 %v194
    %v299 = vunpack.c.l.b16 %v195
    %v300 = vunpack.c.h.b16 %v195
    %v301 = vunpack.c.l.b16 %v196
    %v302 = vunpack.c.h.b16 %v196
    %v303 = vunpack.c.l.b16 %v197
    %v304 = vunpack.c.h.b16 %v197
    %v305 = vunpack.c.l.b16 %v198
    %v306 = vunpack.c.h.b16 %v198
    %v307 = vpack.c.b16 %v245, %v243
    %v308 = vpack.c.b16 %v246, %v244
    %v309 = vpack.c.b16 %v249, %v247
    %v310 = vpack.c.b16 %v250, %v248
    %v311 = vpack.c.b16 %v253, %v251
    %v312 = vpack.c.b16 %v254, %v252
    %v313 = vpack.c.b16 %v257, %v255
    %v314 = vpack.c.b16 %v258, %v256
    %v315 = vpack.c.b16 %v261, %v259
    %v316 = vpack.c.b16 %v262, %v260
    %v317 = vpack.c.b16 %v265, %v263
    %v318 = vpack.c.b16 %v266, %v264
    %v319 = vpack.c.b16 %v269, %v267
    %v320 = vpack.c.b16 %v270, %v268
    %v321 = vpack.c.b16 %v273, %v271
    %v322 = vpack.c.b16 %v274, %v272
    %v323 = vpack.c.b16 %v277, %v275
    %v324 = vpack.c.b16 %v278, %v276
    %v325 = vpack.c.b16 %v281, %v279
    %v326 = vpack.c.b16 %v282, %v280
    %v327 = vpack.c.b16 %v285, %v283
    %v328 = vpack.c.b16 %v286, %v284
    %v329 = vpack.c.b16 %v289, %v287
    %v330 = vpack.c.b16 %v290, %v288
    %v331 = vpack.c.b16 %v293, %v291
    %v332 = vpack.c.b16 %v294, %v292
    %v333 = vpack.c.b16 %v297, %v295
    %v334 = vpack.c.b16 %v298, %v296
    %v335 = vpack.c.b16 %v301, %v299
    %v336 = vpack.c.b16 %v302, %v300
    %v337 = vpack.c.b16 %v305, %v303
    %v338 = vpack.c.b16 %v306, %v304
    %371 = vmatprep.subr.bf16.mxu0 %v308
    %372 = vmatpush1.bf16.msra.mxu0 %v307
    %373 = vmatprep.subr.bf16.mxu0 %v310
    %374 = vmatpush1.bf16.msra.mxu0 %v309
    %375 = vmatprep.subr.bf16.mxu0 %v312
    %376 = vmatpush1.bf16.msra.mxu0 %v311
    %377 = vmatprep.subr.bf16.mxu0 %v314
    %378 = vmatpush1.bf16.msra.mxu0 %v313
    %379 = vmatprep.subr.bf16.mxu0 %v316
    %380 = vmatpush1.bf16.msra.mxu0 %v315
    %381 = vmatprep.subr.bf16.mxu0 %v318
    %382 = vmatpush1.bf16.msra.mxu0 %v317
    %383 = vmatprep.subr.bf16.mxu0 %v320
    %384 = vmatpush1.bf16.msra.mxu0 %v319
    %385 = vmatprep.subr.bf16.mxu0 %v322
    %386 = vmatpush1.bf16.msra.mxu0 %v321
    %387 = vmatprep.subr.bf16.mxu0 %v324
    %388 = vmatpush1.bf16.msra.mxu0 %v323
    %389 = vmatprep.subr.bf16.mxu0 %v326
    %390 = vmatpush1.bf16.msra.mxu0 %v325
    %391 = vmatprep.subr.bf16.mxu0 %v328
    %392 = vmatpush1.bf16.msra.mxu0 %v327
    %393 = vmatprep.subr.bf16.mxu0 %v330
    %394 = vmatpush1.bf16.msra.mxu0 %v329
    %395 = vmatprep.subr.bf16.mxu0 %v332
    %396 = vmatpush1.bf16.msra.mxu0 %v331
    %397 = vmatprep.subr.bf16.mxu0 %v334
    %398 = vmatpush1.bf16.msra.mxu0 %v333
    %399 = vmatprep.subr.bf16.mxu0 %v336
    %400 = vmatpush1.bf16.msra.mxu0 %v335
    %401 = vmatprep.subr.bf16.mxu0 %v338
    %402 = vmatpush1.bf16.msra.mxu0 %v337
    %403 = vmatprep.mubr.bf16.mxu0 %v166
    %404 = vmatmul.mubr.bf16.gmra.mrb[0].mxu0 %v165
    %v405 = vpop.f32.mrb[0].mxu0
    %v406 = vadd.f32 %v204, %v405
    %v407 = vpop.f32.mrb[0].mxu0
    %v408 = vadd.f32 %v208, %v407
    %v409 = vpop.f32.mrb[0].mxu0
    %v410 = vpop.f32.mrb[0].mxu0
    %411 = vdwg.mxu0
    %v412 = vmax.f32 %v406, 0.0
    %v413 = vmax.f32 %v408, 0.0
    %v414 = vpack.c.bf16 %v412, %v412
    %v415 = vpack.c.bf16 %v413, %v413
    %v416 = vld [vmem:[#allocation8] sm:$0xf]
    %v417 = vld [vmem:[#allocation8 + $0x4] sm:$0xf]
    %v418 = vld [vmem:[#allocation8 + $0x8] sm:$0xf]
    %v419 = vld [vmem:[#allocation8 + $0xc] sm:$0xf]
    %v420 = vld [vmem:[#allocation8 + $0x10] sm:$0xf]
    %v421 = vld [vmem:[#allocation8 + $0x14] sm:$0xf]
    %v422 = vld [vmem:[#allocation8 + $0x18] sm:$0xf]
    %v423 = vld [vmem:[#allocation8 + $0x1c] sm:$0xf]
    %v424 = vld [vmem:[#allocation8 + $0x20] sm:$0xf]
    %v425 = vld [vmem:[#allocation8 + $0x24] sm:$0xf]
    %v426 = vld [vmem:[#allocation8 + $0x28] sm:$0xf]
    %v427 = vld [vmem:[#allocation8 + $0x2c] sm:$0xf]
    %v428 = vld [vmem:[#allocation8 + $0x30] sm:$0xf]
    %v429 = vld [vmem:[#allocation8 + $0x34] sm:$0xf]
    %v430 = vld [vmem:[#allocation8 + $0x38] sm:$0xf]
    %v431 = vld [vmem:[#allocation8 + $0x3c] sm:$0xf]
    %v432 = vld [vmem:[#allocation8 + $0x40] sm:$0xf]
    %v433 = vld [vmem:[#allocation8 + $0x44] sm:$0xf]
    %v434 = vld [vmem:[#allocation8 + $0x48] sm:$0xf]
    %v435 = vld [vmem:[#allocation8 + $0x4c] sm:$0xf]
    %v436 = vld [vmem:[#allocation8 + $0x50] sm:$0xf]
    %v437 = vld [vmem:[#allocation8 + $0x54] sm:$0xf]
    %v438 = vld [vmem:[#allocation8 + $0x58] sm:$0xf]
    %v439 = vld [vmem:[#allocation8 + $0x5c] sm:$0xf]
    %v440 = vld [vmem:[#allocation8 + $0x60] sm:$0xf]
    %v441 = vld [vmem:[#allocation8 + $0x64] sm:$0xf]
    %v442 = vld [vmem:[#allocation8 + $0x68] sm:$0xf]
    %v443 = vld [vmem:[#allocation8 + $0x6c] sm:$0xf]
    %v444 = vld [vmem:[#allocation8 + $0x70] sm:$0xf]
    %v445 = vld [vmem:[#allocation8 + $0x74] sm:$0xf]
    %v446 = vld [vmem:[#allocation8 + $0x78] sm:$0xf]
    %v447 = vld [vmem:[#allocation8 + $0x7c] sm:$0xf]
    %v448 = vld [vmem:[%s6] sm:$0x1]
    %v450 = vlaneseq
    %v451 = vshrl.u32 %v450, 7
    %v452 = vsub.s32 0, %v451
    %v453 = vrot.slane %v448, %v452
    %v487 = vunpack.c.l.b16 %v416
    %v488 = vunpack.c.l.b16 %v417
    %v489 = vunpack.c.l.b16 %v418
    %v490 = vunpack.c.l.b16 %v419
    %v491 = vunpack.c.l.b16 %v420
    %v492 = vunpack.c.l.b16 %v421
    %v493 = vunpack.c.l.b16 %v422
    %v494 = vunpack.c.l.b16 %v423
    %v495 = vunpack.c.l.b16 %v424
    %v496 = vunpack.c.l.b16 %v425
    %v497 = vunpack.c.l.b16 %v426
    %v498 = vunpack.c.l.b16 %v427
    %v499 = vunpack.c.l.b16 %v428
    %v500 = vunpack.c.l.b16 %v429
    %v501 = vunpack.c.l.b16 %v430
    %v502 = vunpack.c.l.b16 %v431
    %v503 = vunpack.c.l.b16 %v432
    %v504 = vunpack.c.l.b16 %v433
    %v505 = vunpack.c.l.b16 %v434
    %v506 = vunpack.c.l.b16 %v435
    %v507 = vunpack.c.l.b16 %v436
    %v508 = vunpack.c.l.b16 %v437
    %v509 = vunpack.c.l.b16 %v438
    %v510 = vunpack.c.l.b16 %v439
    %v511 = vunpack.c.l.b16 %v440
    %v512 = vunpack.c.l.b16 %v441
    %v513 = vunpack.c.l.b16 %v442
    %v514 = vunpack.c.l.b16 %v443
    %v515 = vunpack.c.l.b16 %v444
    %v516 = vunpack.c.l.b16 %v445
    %v517 = vunpack.c.l.b16 %v446
    %v518 = vunpack.c.l.b16 %v447
    %v519 = vpack.c.b16 %v488, %v487
    %v520 = vpack.c.b16 %v490, %v489
    %v521 = vpack.c.b16 %v492, %v491
    %v522 = vpack.c.b16 %v494, %v493
    %v523 = vpack.c.b16 %v496, %v495
    %v524 = vpack.c.b16 %v498, %v497
    %v525 = vpack.c.b16 %v500, %v499
    %v526 = vpack.c.b16 %v502, %v501
    %v527 = vpack.c.b16 %v504, %v503
    %v528 = vpack.c.b16 %v506, %v505
    %v529 = vpack.c.b16 %v508, %v507
    %v530 = vpack.c.b16 %v510, %v509
    %v531 = vpack.c.b16 %v512, %v511
    %v532 = vpack.c.b16 %v514, %v513
    %v533 = vpack.c.b16 %v516, %v515
    %v534 = vpack.c.b16 %v518, %v517
    %551 = vmatprep.subr.bf16.mxu0 0
    %552 = vmatpush1.bf16.msra.mxu0 %v519
    %553 = vmatprep.subr.bf16.mxu0 0
    %554 = vmatpush1.bf16.msra.mxu0 %v520
    %555 = vmatprep.subr.bf16.mxu0 0
    %556 = vmatpush1.bf16.msra.mxu0 %v521
    %557 = vmatprep.subr.bf16.mxu0 0
    %558 = vmatpush1.bf16.msra.mxu0 %v522
    %559 = vmatprep.subr.bf16.mxu0 0
    %560 = vmatpush1.bf16.msra.mxu0 %v523
    %561 = vmatprep.subr.bf16.mxu0 0
    %562 = vmatpush1.bf16.msra.mxu0 %v524
    %563 = vmatprep.subr.bf16.mxu0 0
    %564 = vmatpush1.bf16.msra.mxu0 %v525
    %565 = vmatprep.subr.bf16.mxu0 0
    %566 = vmatpush1.bf16.msra.mxu0 %v526
    %567 = vmatprep.subr.bf16.mxu0 0
    %568 = vmatpush1.bf16.msra.mxu0 %v527
    %569 = vmatprep.subr.bf16.mxu0 0
    %570 = vmatpush1.bf16.msra.mxu0 %v528
    %571 = vmatprep.subr.bf16.mxu0 0
    %572 = vmatpush1.bf16.msra.mxu0 %v529
    %573 = vmatprep.subr.bf16.mxu0 0
    %574 = vmatpush1.bf16.msra.mxu0 %v530
    %575 = vmatprep.subr.bf16.mxu0 0
    %576 = vmatpush1.bf16.msra.mxu0 %v531
    %577 = vmatprep.subr.bf16.mxu0 0
    %578 = vmatpush1.bf16.msra.mxu0 %v532
    %579 = vmatprep.subr.bf16.mxu0 0
    %580 = vmatpush1.bf16.msra.mxu0 %v533
    %581 = vmatprep.subr.bf16.mxu0 0
    %582 = vmatpush1.bf16.msra.mxu0 %v534
    %583 = vmatprep.mubr.bf16.mxu0 %v415
    %584 = vmatmul.mubr.bf16.gmra.mrb[0].mxu0 %v414
    %v585 = vpop.f32.mrb[0].mxu0
    %v586 = vadd.f32 %v453, %v585
    %v587 = vpop.f32.mrb[0].mxu0
    %v588 = vpop.f32.mrb[0].mxu0
    %v589 = vpop.f32.mrb[0].mxu0
    %590 = vdwg.mxu0
    %v591 = vlaneseq
    %v592 = vand.u32 %v591, 127
    %vm593 = vcmp.ge.s32.totalorder %v592, 8
    %vm594 = vcmp.lt.s32.totalorder %v592, 16
    %vm595 = vmand %vm593, %vm594
    %v596 = vmax.f32 %v586, -20.0
    %v597 = vmin.f32 %v596, 2.0
    %v598 = vmul.f32 %v597, 1.442695
    %v599 = vpow.pop %v598
    %v600 = vsel %vm595, %v599, %v586
    %601 = vst [vmem:[#allocation10] sm:$0xff] %v600
    // Predicated region
    $region46: #{tpu_custom_call.1} parent=1 // pred_check
      _
    $region47: #{tpu_custom_call.1} parent=1 // pred_check_branch
      %603 = sbr.rel (0) target = $region49
    $region48: #{tpu_custom_call.1} parent=1 // pred_region
      %s605 = ssub.s32 128, 128
      %606 = vsyncadd [#allocation4], %s605
      %s608 = sshll.u32 [#allocation10], 4
      %s609 = int_to_ptr.vmem [resolvable:$true] %s608
      %611 = dma.vmem_to_hbm [thread:$0]  %s609, 128, %s7, [#allocation4]
    $region49: #{tpu_custom_call.1} parent=1 // pred_fallthru
      _
    // Predicated region
    $region50: #{tpu_custom_call.1} parent=1 // pred_check
      _
    $region51: #{tpu_custom_call.1} parent=1 // pred_check_branch
      %613 = sbr.rel (0) target = $region53
    $region52: #{tpu_custom_call.1} parent=1 // pred_region
      %614 = dma.done [#allocation4], 128
    $region53: #{tpu_custom_call.1} parent=1 // pred_fallthru
      _
    %615 = vsyncpa [#allocation3], 1
    %616 = vsyncpa [#allocation6], 1
    %617 = vsyncpa [#allocation9], 1
    %618 = vsyncpa [#allocation4], 1

</llo_original>
